<compile_context>
chip_gen: v6e
topology: v6e:2x2x1
jax: 0.10.0
libtpu: 0.0.40
codegen_flags: <defaults>
</compile_context>

<pallas_src>
import jax
import jax.numpy as jnp
from jax.experimental import pallas as pl
from jax.experimental.pallas import tpu as pltpu

MAP_SIZE = 16          # map_size      -> Linear(map_size*map_size, 128)
FEATURE_SIZE = 4       # feature_size  -> Conv2d(feature_size, 1, 1)
HIDDEN = 128
BN_EPS = 1e-5
MAX_BATCH_TILE = 2048  # 2 x (2048*1024*4B) x-buffers = 16 MB << 32 MiB scoped VMEM
MIN_BATCH_TILE = 256   # below this the ~0.35 us per-grid-step overhead dominates


def critic_kernel(bout_ref, x_ref, w1_ref, b1_ref, w2_ref, o_ref):
    # bout_ref: (1, 1)        SMEM   final-layer bias
    # x_ref   : (TB, K)       VMEM   flattened NCHW activations (f32), K = C*H*W
    # w1_ref  : (K, HIDDEN)   VMEM   conv+BN folded Linear#1 weight (bf16, resident)
    # b1_ref  : (1, HIDDEN)   VMEM   folded Linear#1 bias (f32)
    # w2_ref  : (1, HIDDEN)   VMEM   Linear#2 weight as a row (f32)
    # o_ref   : (TB, 1)       VMEM
    #
    # Single-pass bf16 x bf16 MXU matmul with f32 accumulation.  The x cast is a
    # cheap VPU op hidden under the (dominant) x DMA.
    x = x_ref[...].astype(jnp.bfloat16)
    h = jnp.dot(x, w1_ref[...], preferred_element_type=jnp.float32)
    h = jnp.maximum(h + b1_ref[...], 0.0)                       # (TB, HIDDEN) f32
    # (HIDDEN -> 1) head as VPU multiply + cross-lane reduce: keeps the MXU free and
    # avoids a degenerate N=1 matmul.  All compute units have slack under the DMA
    # roofline, so no further MXU-shape tuning is worthwhile.
    z = jnp.sum(h * w2_ref[...], axis=-1, keepdims=True) + bout_ref[0, 0]
    # Output kept (TB, 1); at 4 B/row of output vs 4 KB/row of input, the masked
    # partial store is negligible (lane-dense (1, TB) slab only matters for B >> 1e5).
    o_ref[...] = 1.0 / (1.0 + jnp.exp(-z))                      # (TB, 1)


def fold_params(conv_w, conv_b, bn_gamma, bn_beta, bn_mean, bn_var, w1, b1, w2, out_b):
    """Fold Conv2d(C, 1, k=1) + eval-mode BatchNorm2d(1) into the first Linear.

    conv_w: (1, C) 1x1-conv weight (out_channels=1)
    w1:     (HW, HIDDEN), b1: (1, HIDDEN)   -- Linear #1 (already in x @ W layout)
    w2:     (HIDDEN, 1)                     -- Linear #2
    Folding is done in f32; W1 is then stored bf16 for a single-pass MXU matmul.
    """
    HW, hid = w1.shape
    C = conv_w.shape[1]
    bn_scale = bn_gamma / jnp.sqrt(bn_var + BN_EPS)
    # w1f[c*HW + n, :] = conv_w[c] * bn_scale * w1[n, :]
    w1f = ((conv_w[0] * bn_scale)[:, None, None] * w1[None, :, :]).reshape(C * HW, hid)
    shift = (conv_b - bn_mean) * bn_scale + bn_beta
    b1f = b1 + shift * jnp.sum(w1, axis=0, keepdims=True)
    w2row = w2.reshape(1, hid)
    bout = jnp.full((1, 1), out_b, dtype=jnp.float32)
    return (w1f.astype(jnp.bfloat16),          # 256 KB resident, single-pass MXU operand
            b1f.astype(jnp.float32),
            w2row.astype(jnp.float32), bout)


def _batch_tile(B: int) -> int:
    """Pick the batch tile: big enough to amortize per-step overhead, small enough to
    give >= 4 grid steps for v7x's two TensorCores, multiple of 8 sublanes."""
    if B <= MIN_BATCH_TILE:
        return B                       # single grid step; nothing to amortize/shard
    tb = -(-B // 4)                    # cdiv(B, 4) -> >= 4 steps when possible
    tb = ((tb + 7) // 8) * 8
    return max(MIN_BATCH_TILE, min(MAX_BATCH_TILE, tb))


def critic_forward(states, folded_params):
    """states: (B, C, H, W) float32 (PyTorch NCHW). Returns (B, 1) float32."""
    w1f, b1f, w2row, bout = folded_params
    B = states.shape[0]
    K = w1f.shape[0]
    # .detach() only stops gradients; the forward value is unchanged.
    # Row-major NCHW flatten is a zero-copy view (no HBM transpose).
    # If the producer of `states` can emit bf16, feed it here directly (halves the
    # dominant HBM traffic); do NOT add a standalone f32->bf16 cast in the wrapper --
    # that would cost a full extra HBM read+write pass.
    x = states.reshape(B, K)

    tb = _batch_tile(B)
    grid = (pl.cdiv(B, tb),)
    # Note: a partial last tile reads OOB-padded rows; their results are discarded by
    # Pallas, so valid rows are unaffected.

    return pl.pallas_call(
        critic_kernel,
        out_shape=jax.ShapeDtypeStruct((B, 1), jnp.float32),
        grid=grid,
        in_specs=[
            pl.BlockSpec((1, 1), lambda i: (0, 0),
                         memory_space=pltpu.MemorySpace.SMEM),   # out-layer bias
            pl.BlockSpec((tb, K), lambda i: (i, 0)),             # batch-tiled activations
            pl.BlockSpec((K, HIDDEN), lambda i: (0, 0)),         # folded W1 (bf16, resident)
            pl.BlockSpec((1, HIDDEN), lambda i: (0, 0)),         # folded b1
            pl.BlockSpec((1, HIDDEN), lambda i: (0, 0)),         # w2 row
        ],
        out_specs=pl.BlockSpec((tb, 1), lambda i: (i, 0)),
        compiler_params=pltpu.CompilerParams(
            dimension_semantics=("parallel",),   # shard batch tiles across v7x's 2 TCs
        ),
    )(bout, x, w1f, b1f, w2row)


def critic_ref(states, conv_w, conv_b, bn_gamma, bn_beta, bn_mean, bn_var,
               w1, b1, w2, out_b):
    """Pure-JAX f32 reference of the original (unfolded) forward pass."""
    B, C, H, W = states.shape
    x = states.reshape(B, C, H * W)
    y = jnp.einsum("bcn,c->bn", x, conv_w[0]) + conv_b
    scale = bn_gamma / jnp.sqrt(bn_var + BN_EPS)
    y = (y - bn_mean) * scale + bn_beta
    h = jnp.maximum(y @ w1 + b1, 0.0)
    z = h @ w2 + out_b
    return 1.0 / (1.0 + jnp.exp(-z))


if __name__ == "__main__":
    C, H, W = FEATURE_SIZE, MAP_SIZE, MAP_SIZE
    HW = H * W

    key = jax.random.PRNGKey(0)
    ks = jax.random.split(key, 6)

    # Deterministic synthetic parameters (shapes from the module's __init__).
    conv_w = jax.random.normal(ks[1], (1, C), jnp.float32) * 0.2          # Conv2d(C,1,1)
    w1 = jax.random.normal(ks[2], (HW, HIDDEN), jnp.float32) / jnp.sqrt(float(HW))
    b1 = jax.random.normal(ks[3], (1, HIDDEN), jnp.float32) * 0.01
    w2 = jax.random.normal(ks[4], (HIDDEN, 1), jnp.float32) / jnp.sqrt(float(HIDDEN))

    conv_b, out_b = 0.05, 0.02
    bn_gamma, bn_beta, bn_mean, bn_var = 1.0, 0.1, 0.05, 0.9

    folded = fold_params(conv_w, conv_b, bn_gamma, bn_beta, bn_mean, bn_var,
                         w1, b1, w2, out_b)

    # bf16 matmul operands -> relaxed tolerance vs the f32 reference (per review).
    RTOL, ATOL = 2e-2, 5e-3

    # --- small-batch check (single grid step) -------------------------------------
    B = 2
    states = jax.random.normal(ks[0], (B, C, H, W), jnp.float32)
    out = jax.block_until_ready(critic_forward(states, folded))
    ref = critic_ref(states, conv_w, conv_b, bn_gamma, bn_beta, bn_mean, bn_var,
                     w1, b1, w2, out_b)
    assert out.shape == (B, 1), out.shape
    assert jnp.allclose(out, ref, rtol=RTOL, atol=ATOL), (out, ref)

    # --- multi-tile check (exercises batch tiling + partial last tile) ------------
    B2 = 592   # -> tb=256, grid=3, last tile partial (80 rows)
    states2 = jax.random.normal(ks[5], (B2, C, H, W), jnp.float32)
    out2 = jax.block_until_ready(critic_forward(states2, folded))
    ref2 = critic_ref(states2, conv_w, conv_b, bn_gamma, bn_beta, bn_mean, bn_var,
                      w1, b1, w2, out_b)
    assert out2.shape == (B2, 1), out2.shape
    assert jnp.allclose(out2, ref2, rtol=RTOL, atol=ATOL)

    print("KERNEL_OK")
</pallas_src>

<mosaic_0001>
module attributes {stable_mosaic.version = 11 : i64} {
  func.func @critic_kernel(%arg0: i32, %arg1: memref<1x1xf32, #tpu.memory_space<smem>>, %arg2: memref<2x1024xf32, #tpu.memory_space<vmem>>, %arg3: memref<1024x128xbf16, #tpu.memory_space<vmem>>, %arg4: memref<1x128xf32, #tpu.memory_space<vmem>>, %arg5: memref<1x128xf32, #tpu.memory_space<vmem>>, %arg6: memref<2x1xf32, #tpu.memory_space<vmem>>) attributes {dimension_semantics = [#tpu.dimension_semantics<parallel>], iteration_bounds = array<i64: 1>, scalar_prefetch = 0 : i64, scratch_operands = 0 : i64, tpu.core_type = #tpu.core_type<tc>, window_params = [{transform_indices = @transform_0, window_bounds = array<i64: 1, 1>}, {transform_indices = @transform_1, window_bounds = array<i64: 2, 1024>}, {pipeline_mode = #tpu.pipeline_mode<synchronous>, transform_indices = @transform_2, window_bounds = array<i64: 1024, 128>}, {pipeline_mode = #tpu.pipeline_mode<synchronous>, transform_indices = @transform_3, window_bounds = array<i64: 1, 128>}, {pipeline_mode = #tpu.pipeline_mode<synchronous>, transform_indices = @transform_4, window_bounds = array<i64: 1, 128>}, {transform_indices = @transform_5, window_bounds = array<i64: 2, 1>}]} {
    %c0 = arith.constant 0 : index
    %c0_0 = arith.constant 0 : index
    %0 = vector.load %arg2[%c0, %c0_0] : memref<2x1024xf32, #tpu.memory_space<vmem>>, vector<2x1024xf32>
    %1 = arith.truncf %0 : vector<2x1024xf32> to vector<2x1024xbf16>
    %c0_1 = arith.constant 0 : index
    %c0_2 = arith.constant 0 : index
    %2 = vector.load %arg3[%c0_1, %c0_2] : memref<1024x128xbf16, #tpu.memory_space<vmem>>, vector<1024x128xbf16>
    %cst = arith.constant dense<0.000000e+00> : vector<2x128xf32>
    %3 = tpu.matmul %1, %2, %cst {dimension_numbers = #tpu.dot_dimension_numbers<[1], [0], [0], [1], [0, 0, 1, 1], [], []>} : vector<2x1024xbf16>, vector<1024x128xbf16>, vector<2x128xf32> -> vector<2x128xf32>
    %c0_3 = arith.constant 0 : index
    %c0_4 = arith.constant 0 : index
    %4 = vector.load %arg4[%c0_3, %c0_4] : memref<1x128xf32, #tpu.memory_space<vmem>>, vector<1x128xf32>
    %5 = vector.broadcast %4 : vector<1x128xf32> to vector<2x128xf32>
    %6 = arith.addf %3, %5 : vector<2x128xf32>
    %cst_5 = arith.constant 0.000000e+00 : f32
    %7 = vector.broadcast %cst_5 : f32 to vector<2x128xf32>
    %8 = arith.maximumf %6, %7 : vector<2x128xf32>
    %c0_6 = arith.constant 0 : index
    %c0_7 = arith.constant 0 : index
    %9 = vector.load %arg5[%c0_6, %c0_7] : memref<1x128xf32, #tpu.memory_space<vmem>>, vector<1x128xf32>
    %10 = vector.broadcast %9 : vector<1x128xf32> to vector<2x128xf32>
    %11 = arith.mulf %8, %10 : vector<2x128xf32>
    %cst_8 = arith.constant dense<0.000000e+00> : vector<2xf32>
    %12 = vector.multi_reduction <add>, %11, %cst_8 [1] : vector<2x128xf32> to vector<2xf32>
    %13 = vector.shape_cast %12 : vector<2xf32> to vector<2x1xf32>
    %c0_9 = arith.constant 0 : index
    %c0_10 = arith.constant 0 : index
    %14 = memref.load %arg1[%c0_9, %c0_10] : memref<1x1xf32, #tpu.memory_space<smem>>
    %15 = vector.broadcast %14 : f32 to vector<2x1xf32>
    %16 = arith.addf %13, %15 : vector<2x1xf32>
    %cst_11 = arith.constant 0.000000e+00 : f32
    %17 = vector.broadcast %cst_11 : f32 to vector<2x1xf32>
    %18 = arith.subf %17, %16 : vector<2x1xf32>
    %19 = math.exp %18 : vector<2x1xf32>
    %cst_12 = arith.constant 1.000000e+00 : f32
    %20 = vector.broadcast %cst_12 : f32 to vector<2x1xf32>
    %21 = arith.addf %20, %19 : vector<2x1xf32>
    %cst_13 = arith.constant 1.000000e+00 : f32
    %22 = vector.broadcast %cst_13 : f32 to vector<2x1xf32>
    %23 = arith.divf %22, %21 : vector<2x1xf32>
    %c0_14 = arith.constant 0 : index
    %c0_15 = arith.constant 0 : index
    %24 = vector.load %arg6[%c0_14, %c0_15] : memref<2x1xf32, #tpu.memory_space<vmem>>, vector<2x1xf32>
    tpu.vector_store %arg6[%c0_14, %c0_15], %23 {strides = array<i32>} : memref<2x1xf32, #tpu.memory_space<vmem>>, vector<2x1xf32>,
    return
  }
  func.func @transform_0(%arg0: i32) -> (i32, i32) {
    %c0_i32 = arith.constant 0 : i32
    %c0_i32_0 = arith.constant 0 : i32
    %c0_i32_1 = arith.constant 0 : i32
    return %c0_i32, %c0_i32_0 : i32, i32
  }
  func.func @transform_1(%arg0: i32) -> (i32, i32) {
    %c0_i32 = arith.constant 0 : i32
    %c0_i32_0 = arith.constant 0 : i32
    return %arg0, %c0_i32 : i32, i32
  }
  func.func @transform_2(%arg0: i32) -> (i32, i32) {
    %c0_i32 = arith.constant 0 : i32
    %c0_i32_0 = arith.constant 0 : i32
    %c0_i32_1 = arith.constant 0 : i32
    return %c0_i32, %c0_i32_0 : i32, i32
  }
  func.func @transform_3(%arg0: i32) -> (i32, i32) {
    %c0_i32 = arith.constant 0 : i32
    %c0_i32_0 = arith.constant 0 : i32
    %c0_i32_1 = arith.constant 0 : i32
    return %c0_i32, %c0_i32_0 : i32, i32
  }
  func.func @transform_4(%arg0: i32) -> (i32, i32) {
    %c0_i32 = arith.constant 0 : i32
    %c0_i32_0 = arith.constant 0 : i32
    %c0_i32_1 = arith.constant 0 : i32
    return %c0_i32, %c0_i32_0 : i32, i32
  }
  func.func @transform_5(%arg0: i32) -> (i32, i32) {
    %c0_i32 = arith.constant 0 : i32
    %c0_i32_0 = arith.constant 0 : i32
    return %arg0, %c0_i32 : i32, i32
  }
}

</mosaic_0001>

<llo_original>
// kernel: tpu_custom_call.1
$region0: #{tpu_custom_call.1}
  #allocation0 [shape = 'u32[]', space=smem, size = 0x4, offset = 0x4, fixed_abs, tag = 'smem constant byte address 0x4 - core index']
  #allocation1 [shape = 'u32[144,128]{1,0:T(1,128)}', space=vmem, size = 0x12000, scoped, tag = 'internal scratch']
  #allocation2 [shape = 'f32[1,1]{1,0:T(1,128)S(6)}', space=smem, size = 0x200, scoped, tag = 'scoped memory for tpu_custom_call.1']
  %s0 = inlined_call_operand.<no memory space> [shape: f32[1,1], index: 0, kind: input, shape index: {}]
  %s1 = inlined_call_operand.hbm [shape: f32[2,1024], index: 1, kind: input, shape index: {}]
  %s2 = inlined_call_operand.hbm [shape: bf16[1024,128], index: 2, kind: input, shape index: {}]
  %s3 = inlined_call_operand.vmem [shape: f32[1,128], index: 3, kind: input, shape index: {}]
  %s4 = inlined_call_operand.vmem [shape: f32[1,128], index: 4, kind: input, shape index: {}]
  %s5 = inlined_call_operand.vmem [shape: f32[2,1], index: 5, kind: output, shape index: {}]
  %s6 = sld [smem:[#allocation0]]
  $region38: #{tpu_custom_call.1} parent=0
    _
  %s8 = ssub.s32 1, %s6
  %s9 = scalar_select 0, %s8, %s6
  %10 = sst [smem:[#allocation2]] %s0
  $region1: #{tpu_custom_call.1} parent=0
    #allocation3 [shape = 'u8[8192]{0}', space=vmem, size = 0x2000, scoped, tag = 'input window, operand 1, single buffered']
    #allocation4 [shape = 's32[1]{0}', space=sflag, size = 0x4, scoped, tag = 'scoped memory for tpu_custom_call.1']
    #allocation5 [shape = 'u8[262144]{0}', space=vmem, size = 0x40000, scoped, tag = 'input window, operand 2, single buffered']
    #allocation6 [shape = 's32[1]{0}', space=sflag, size = 0x4, scoped, tag = 'scoped memory for tpu_custom_call.1']
    %11 = vsyncpa [#allocation4], 0
    %12 = vsyncpa [#allocation6], 0
    // Predicated region
    $region2: #{tpu_custom_call.1} parent=1 // pred_check
      _
    $region3: #{tpu_custom_call.1} parent=1 // pred_check_branch
      %14 = sbr.rel (0) target = $region5
    $region4: #{tpu_custom_call.1} parent=1 // pred_region
      _
    $region5: #{tpu_custom_call.1} parent=1 // pred_fallthru
      _
    // Predicated region
    $region6: #{tpu_custom_call.1} parent=1 // pred_check
      _
    $region7: #{tpu_custom_call.1} parent=1 // pred_check_branch
      %16 = sbr.rel (0) target = $region9
    $region8: #{tpu_custom_call.1} parent=1 // pred_region
      %s18 = ssub.s32 256, 256
      %19 = vsyncadd [#allocation4], %s18
      %s21 = sshll.u32 [#allocation3], 4
      %s22 = int_to_ptr.vmem [resolvable:$true] %s21
      %24 = dma.hbm_to_vmem [thread:$0]  %s1, 256, %s22, [#allocation4]
    $region9: #{tpu_custom_call.1} parent=1 // pred_fallthru
      _
    // Predicated region
    $region10: #{tpu_custom_call.1} parent=1 // pred_check
      _
    $region11: #{tpu_custom_call.1} parent=1 // pred_check_branch
      %26 = sbr.rel (0) target = $region13
    $region12: #{tpu_custom_call.1} parent=1 // pred_region
      %s28 = ssub.s32 8192, 8192
      %29 = vsyncadd [#allocation6], %s28
      %s30 = sshll.u32 [#allocation5], 4
      %s31 = int_to_ptr.vmem [resolvable:$true] %s30
      %36 = dma.hbm_to_vmem [thread:$0]  %s2, 8192, %s31, [#allocation6], 64, 64, 4
    $region13: #{tpu_custom_call.1} parent=1 // pred_fallthru
      _
    // Predicated region
    $region14: #{tpu_custom_call.1} parent=1 // pred_check
      _
    $region15: #{tpu_custom_call.1} parent=1 // pred_check_branch
      %38 = sbr.rel (0) target = $region17
    $region16: #{tpu_custom_call.1} parent=1 // pred_region
      _
    $region17: #{tpu_custom_call.1} parent=1 // pred_fallthru
      _
    // Predicated region
    $region18: #{tpu_custom_call.1} parent=1 // pred_check
      _
    $region19: #{tpu_custom_call.1} parent=1 // pred_check_branch
      %40 = sbr.rel (0) target = $region21
    $region20: #{tpu_custom_call.1} parent=1 // pred_region
      _
    $region21: #{tpu_custom_call.1} parent=1 // pred_fallthru
      _
    // Predicated region
    $region22: #{tpu_custom_call.1} parent=1 // pred_check
      _
    $region23: #{tpu_custom_call.1} parent=1 // pred_check_branch
      %42 = sbr.rel (0) target = $region25
    $region24: #{tpu_custom_call.1} parent=1 // pred_region
      %43 = dma.done [#allocation4], 256
    $region25: #{tpu_custom_call.1} parent=1 // pred_fallthru
      _
    // Predicated region
    $region26: #{tpu_custom_call.1} parent=1 // pred_check
      _
    $region27: #{tpu_custom_call.1} parent=1 // pred_check_branch
      %45 = sbr.rel (0) target = $region29
    $region28: #{tpu_custom_call.1} parent=1 // pred_region
      %46 = dma.done [#allocation6], 8192
    $region29: #{tpu_custom_call.1} parent=1 // pred_fallthru
      _
    %v48 = vld [vmem:[#allocation3] sm:$0xff]
    %v49 = vld [vmem:[#allocation3 + $0x8] sm:$0xff]
    %v52 = vcombine.high %v48, %v48
    %v54 = vunpack.c.l.s4 1983009808
    %v55 = vunpack.c.0.s8 %v54
    %v56 = vlaneseq
    %v57 = vshrl.u32 %v56, 7
    %v58 = vsub.s32 %v55, %v57
    %v59 = vrot.slane %v48, %v58
    %v61 = vunpack.c.l.s4 1983009808
    %v62 = vunpack.c.0.s8 %v61
    %v63 = vlaneseq
    %v64 = vshrl.u32 %v63, 7
    %v65 = vsub.s32 %v62, %v64
    %v66 = vrot.slane %v52, %v65
    %v67 = vcombine.high %v59, %v59
    %v68 = vcombine.high %v66, %v66
    %v69 = vcombine.high %v49, %v49
    %v71 = vunpack.c.l.s4 1983009808
    %v72 = vunpack.c.0.s8 %v71
    %v73 = vlaneseq
    %v74 = vshrl.u32 %v73, 7
    %v75 = vsub.s32 %v72, %v74
    %v76 = vrot.slane %v49, %v75
    %v78 = vunpack.c.l.s4 1983009808
    %v79 = vunpack.c.0.s8 %v78
    %v80 = vlaneseq
    %v81 = vshrl.u32 %v80, 7
    %v82 = vsub.s32 %v79, %v81
    %v83 = vrot.slane %v69, %v82
    %v84 = vcombine.high %v76, %v76
    %v85 = vcombine.high %v83, %v83
    %v94 = vpack.c.bf16 %v59, %v59
    %v95 = vpack.c.bf16 %v67, %v67
    %v96 = vpack.c.bf16 %v66, %v66
    %v97 = vpack.c.bf16 %v68, %v68
    %v98 = vpack.c.bf16 %v76, %v76
    %v99 = vpack.c.bf16 %v84, %v84
    %v100 = vpack.c.bf16 %v83, %v83
    %v101 = vpack.c.bf16 %v85, %v85
    %v102 = vld [vmem:[#allocation5] sm:$0xf]
    %v103 = vld [vmem:[#allocation5 + $0x4] sm:$0xf]
    %v104 = vld [vmem:[#allocation5 + $0x8] sm:$0xf]
    %v105 = vld [vmem:[#allocation5 + $0xc] sm:$0xf]
    %v106 = vld [vmem:[#allocation5 + $0x10] sm:$0xf]
    %v107 = vld [vmem:[#allocation5 + $0x14] sm:$0xf]
    %v108 = vld [vmem:[#allocation5 + $0x18] sm:$0xf]
    %v109 = vld [vmem:[#allocation5 + $0x1c] sm:$0xf]
    %v110 = vld [vmem:[#allocation5 + $0x20] sm:$0xf]
    %v111 = vld [vmem:[#allocation5 + $0x24] sm:$0xf]
    %v112 = vld [vmem:[#allocation5 + $0x28] sm:$0xf]
    %v113 = vld [vmem:[#allocation5 + $0x2c] sm:$0xf]
    %v114 = vld [vmem:[#allocation5 + $0x30] sm:$0xf]
    %v115 = vld [vmem:[#allocation5 + $0x34] sm:$0xf]
    %v116 = vld [vmem:[#allocation5 + $0x38] sm:$0xf]
    %v117 = vld [vmem:[#allocation5 + $0x3c] sm:$0xf]
    %v118 = vld [vmem:[#allocation5 + $0x40] sm:$0xf]
    %v119 = vld [vmem:[#allocation5 + $0x44] sm:$0xf]
    %v120 = vld [vmem:[#allocation5 + $0x48] sm:$0xf]
    %v121 = vld [vmem:[#allocation5 + $0x4c] sm:$0xf]
    %v122 = vld [vmem:[#allocation5 + $0x50] sm:$0xf]
    %v123 = vld [vmem:[#allocation5 + $0x54] sm:$0xf]
    %v124 = vld [vmem:[#allocation5 + $0x58] sm:$0xf]
    %v125 = vld [vmem:[#allocation5 + $0x5c] sm:$0xf]
    %v126 = vld [vmem:[#allocation5 + $0x60] sm:$0xf]
    %v127 = vld [vmem:[#allocation5 + $0x64] sm:$0xf]
    %v128 = vld [vmem:[#allocation5 + $0x68] sm:$0xf]
    %v129 = vld [vmem:[#allocation5 + $0x6c] sm:$0xf]
    %v130 = vld [vmem:[#allocation5 + $0x70] sm:$0xf]
    %v131 = vld [vmem:[#allocation5 + $0x74] sm:$0xf]
    %v132 = vld [vmem:[#allocation5 + $0x78] sm:$0xf]
    %v133 = vld [vmem:[#allocation5 + $0x7c] sm:$0xf]
    %v134 = vld [vmem:[#allocation5 + $0x80] sm:$0xf]
    %v135 = vld [vmem:[#allocation5 + $0x84] sm:$0xf]
    %v136 = vld [vmem:[#allocation5 + $0x88] sm:$0xf]
    %v137 = vld [vmem:[#allocation5 + $0x8c] sm:$0xf]
    %v138 = vld [vmem:[#allocation5 + $0x90] sm:$0xf]
    %v139 = vld [vmem:[#allocation5 + $0x94] sm:$0xf]
    %v140 = vld [vmem:[#allocation5 + $0x98] sm:$0xf]
    %v141 = vld [vmem:[#allocation5 + $0x9c] sm:$0xf]
    %v142 = vld [vmem:[#allocation5 + $0xa0] sm:$0xf]
    %v143 = vld [vmem:[#allocation5 + $0xa4] sm:$0xf]
    %v144 = vld [vmem:[#allocation5 + $0xa8] sm:$0xf]
    %v145 = vld [vmem:[#allocation5 + $0xac] sm:$0xf]
    %v146 = vld [vmem:[#allocation5 + $0xb0] sm:$0xf]
    %v147 = vld [vmem:[#allocation5 + $0xb4] sm:$0xf]
    %v148 = vld [vmem:[#allocation5 + $0xb8] sm:$0xf]
    %v149 = vld [vmem:[#allocation5 + $0xbc] sm:$0xf]
    %v150 = vld [vmem:[#allocation5 + $0xc0] sm:$0xf]
    %v151 = vld [vmem:[#allocation5 + $0xc4] sm:$0xf]
    %v152 = vld [vmem:[#allocation5 + $0xc8] sm:$0xf]
    %v153 = vld [vmem:[#allocation5 + $0xcc] sm:$0xf]
    %v154 = vld [vmem:[#allocation5 + $0xd0] sm:$0xf]
    %v155 = vld [vmem:[#allocation5 + $0xd4] sm:$0xf]
    %v156 = vld [vmem:[#allocation5 + $0xd8] sm:$0xf]
    %v157 = vld [vmem:[#allocation5 + $0xdc] sm:$0xf]
    %v158 = vld [vmem:[#allocation5 + $0xe0] sm:$0xf]
    %v159 = vld [vmem:[#allocation5 + $0xe4] sm:$0xf]
    %v160 = vld [vmem:[#allocation5 + $0xe8] sm:$0xf]
    %v161 = vld [vmem:[#allocation5 + $0xec] sm:$0xf]
    %v162 = vld [vmem:[#allocation5 + $0xf0] sm:$0xf]
    %v163 = vld [vmem:[#allocation5 + $0xf4] sm:$0xf]
    %v164 = vld [vmem:[#allocation5 + $0xf8] sm:$0xf]
    %v165 = vld [vmem:[#allocation5 + $0xfc] sm:$0xf]
    %v166 = vld [vmem:[#allocation5 + $0x100] sm:$0xf]
    %v167 = vld [vmem:[#allocation5 + $0x104] sm:$0xf]
    %v168 = vld [vmem:[#allocation5 + $0x108] sm:$0xf]
    %v169 = vld [vmem:[#allocation5 + $0x10c] sm:$0xf]
    %v170 = vld [vmem:[#allocation5 + $0x110] sm:$0xf]
    %v171 = vld [vmem:[#allocation5 + $0x114] sm:$0xf]
    %v172 = vld [vmem:[#allocation5 + $0x118] sm:$0xf]
    %v173 = vld [vmem:[#allocation5 + $0x11c] sm:$0xf]
    %v174 = vld [vmem:[#allocation5 + $0x120] sm:$0xf]
    %v175 = vld [vmem:[#allocation5 + $0x124] sm:$0xf]
    %v176 = vld [vmem:[#allocation5 + $0x128] sm:$0xf]
    %v177 = vld [vmem:[#allocation5 + $0x12c] sm:$0xf]
    %v178 = vld [vmem:[#allocation5 + $0x130] sm:$0xf]
    %v179 = vld [vmem:[#allocation5 + $0x134] sm:$0xf]
    %v180 = vld [vmem:[#allocation5 + $0x138] sm:$0xf]
    %v181 = vld [vmem:[#allocation5 + $0x13c] sm:$0xf]
    %v182 = vld [vmem:[#allocation5 + $0x140] sm:$0xf]
    %v183 = vld [vmem:[#allocation5 + $0x144] sm:$0xf]
    %v184 = vld [vmem:[#allocation5 + $0x148] sm:$0xf]
    %v185 = vld [vmem:[#allocation5 + $0x14c] sm:$0xf]
    %v186 = vld [vmem:[#allocation5 + $0x150] sm:$0xf]
    %v187 = vld [vmem:[#allocation5 + $0x154] sm:$0xf]
    %v188 = vld [vmem:[#allocation5 + $0x158] sm:$0xf]
    %v189 = vld [vmem:[#allocation5 + $0x15c] sm:$0xf]
    %v190 = vld [vmem:[#allocation5 + $0x160] sm:$0xf]
    %v191 = vld [vmem:[#allocation5 + $0x164] sm:$0xf]
    %v192 = vld [vmem:[#allocation5 + $0x168] sm:$0xf]
    %v193 = vld [vmem:[#allocation5 + $0x16c] sm:$0xf]
    %v194 = vld [vmem:[#allocation5 + $0x170] sm:$0xf]
    %v195 = vld [vmem:[#allocation5 + $0x174] sm:$0xf]
    %v196 = vld [vmem:[#allocation5 + $0x178] sm:$0xf]
    %v197 = vld [vmem:[#allocation5 + $0x17c] sm:$0xf]
    %v198 = vld [vmem:[#allocation5 + $0x180] sm:$0xf]
    %v199 = vld [vmem:[#allocation5 + $0x184] sm:$0xf]
    %v200 = vld [vmem:[#allocation5 + $0x188] sm:$0xf]
    %v201 = vld [vmem:[#allocation5 + $0x18c] sm:$0xf]
    %v202 = vld [vmem:[#allocation5 + $0x190] sm:$0xf]
    %v203 = vld [vmem:[#allocation5 + $0x194] sm:$0xf]
    %v204 = vld [vmem:[#allocation5 + $0x198] sm:$0xf]
    %v205 = vld [vmem:[#allocation5 + $0x19c] sm:$0xf]
    %v206 = vld [vmem:[#allocation5 + $0x1a0] sm:$0xf]
    %v207 = vld [vmem:[#allocation5 + $0x1a4] sm:$0xf]
    %v208 = vld [vmem:[#allocation5 + $0x1a8] sm:$0xf]
    %v209 = vld [vmem:[#allocation5 + $0x1ac] sm:$0xf]
    %v210 = vld [vmem:[#allocation5 + $0x1b0] sm:$0xf]
    %v211 = vld [vmem:[#allocation5 + $0x1b4] sm:$0xf]
    %v212 = vld [vmem:[#allocation5 + $0x1b8] sm:$0xf]
    %v213 = vld [vmem:[#allocation5 + $0x1bc] sm:$0xf]
    %v214 = vld [vmem:[#allocation5 + $0x1c0] sm:$0xf]
    %v215 = vld [vmem:[#allocation5 + $0x1c4] sm:$0xf]
    %v216 = vld [vmem:[#allocation5 + $0x1c8] sm:$0xf]
    %v217 = vld [vmem:[#allocation5 + $0x1cc] sm:$0xf]
    %v218 = vld [vmem:[#allocation5 + $0x1d0] sm:$0xf]
    %v219 = vld [vmem:[#allocation5 + $0x1d4] sm:$0xf]
    %v220 = vld [vmem:[#allocation5 + $0x1d8] sm:$0xf]
    %v221 = vld [vmem:[#allocation5 + $0x1dc] sm:$0xf]
    %v222 = vld [vmem:[#allocation5 + $0x1e0] sm:$0xf]
    %v223 = vld [vmem:[#allocation5 + $0x1e4] sm:$0xf]
    %v224 = vld [vmem:[#allocation5 + $0x1e8] sm:$0xf]
    %v225 = vld [vmem:[#allocation5 + $0x1ec] sm:$0xf]
    %v226 = vld [vmem:[#allocation5 + $0x1f0] sm:$0xf]
    %v227 = vld [vmem:[#allocation5 + $0x1f4] sm:$0xf]
    %v228 = vld [vmem:[#allocation5 + $0x1f8] sm:$0xf]
    %v229 = vld [vmem:[#allocation5 + $0x1fc] sm:$0xf]
    %v230 = vld [vmem:[%s3] sm:$0x1]
    %v232 = vlaneseq
    %v233 = vshrl.u32 %v232, 7
    %v234 = vsub.s32 0, %v233
    %v235 = vrot.slane %v230, %v234
    %v365 = vunpack.c.l.b16 %v102
    %v366 = vunpack.c.l.b16 %v103
    %v367 = vunpack.c.l.b16 %v104
    %v368 = vunpack.c.l.b16 %v105
    %v369 = vunpack.c.l.b16 %v106
    %v370 = vunpack.c.l.b16 %v107
    %v371 = vunpack.c.l.b16 %v108
    %v372 = vunpack.c.l.b16 %v109
    %v373 = vunpack.c.l.b16 %v110
    %v374 = vunpack.c.l.b16 %v111
    %v375 = vunpack.c.l.b16 %v112
    %v376 = vunpack.c.l.b16 %v113
    %v377 = vunpack.c.l.b16 %v114
    %v378 = vunpack.c.l.b16 %v115
    %v379 = vunpack.c.l.b16 %v116
    %v380 = vunpack.c.l.b16 %v117
    %v381 = vunpack.c.l.b16 %v118
    %v382 = vunpack.c.l.b16 %v119
    %v383 = vunpack.c.l.b16 %v120
    %v384 = vunpack.c.l.b16 %v121
    %v385 = vunpack.c.l.b16 %v122
    %v386 = vunpack.c.l.b16 %v123
    %v387 = vunpack.c.l.b16 %v124
    %v388 = vunpack.c.l.b16 %v125
    %v389 = vunpack.c.l.b16 %v126
    %v390 = vunpack.c.l.b16 %v127
    %v391 = vunpack.c.l.b16 %v128
    %v392 = vunpack.c.l.b16 %v129
    %v393 = vunpack.c.l.b16 %v130
    %v394 = vunpack.c.l.b16 %v131
    %v395 = vunpack.c.l.b16 %v132
    %v396 = vunpack.c.l.b16 %v133
    %v397 = vunpack.c.l.b16 %v134
    %v398 = vunpack.c.l.b16 %v135
    %v399 = vunpack.c.l.b16 %v136
    %v400 = vunpack.c.l.b16 %v137
    %v401 = vunpack.c.l.b16 %v138
    %v402 = vunpack.c.l.b16 %v139
    %v403 = vunpack.c.l.b16 %v140
    %v404 = vunpack.c.l.b16 %v141
    %v405 = vunpack.c.l.b16 %v142
    %v406 = vunpack.c.l.b16 %v143
    %v407 = vunpack.c.l.b16 %v144
    %v408 = vunpack.c.l.b16 %v145
    %v409 = vunpack.c.l.b16 %v146
    %v410 = vunpack.c.l.b16 %v147
    %v411 = vunpack.c.l.b16 %v148
    %v412 = vunpack.c.l.b16 %v149
    %v413 = vunpack.c.l.b16 %v150
    %v414 = vunpack.c.l.b16 %v151
    %v415 = vunpack.c.l.b16 %v152
    %v416 = vunpack.c.l.b16 %v153
    %v417 = vunpack.c.l.b16 %v154
    %v418 = vunpack.c.l.b16 %v155
    %v419 = vunpack.c.l.b16 %v156
    %v420 = vunpack.c.l.b16 %v157
    %v421 = vunpack.c.l.b16 %v158
    %v422 = vunpack.c.l.b16 %v159
    %v423 = vunpack.c.l.b16 %v160
    %v424 = vunpack.c.l.b16 %v161
    %v425 = vunpack.c.l.b16 %v162
    %v426 = vunpack.c.l.b16 %v163
    %v427 = vunpack.c.l.b16 %v164
    %v428 = vunpack.c.l.b16 %v165
    %v429 = vunpack.c.l.b16 %v166
    %v430 = vunpack.c.l.b16 %v167
    %v431 = vunpack.c.l.b16 %v168
    %v432 = vunpack.c.l.b16 %v169
    %v433 = vunpack.c.l.b16 %v170
    %v434 = vunpack.c.l.b16 %v171
    %v435 = vunpack.c.l.b16 %v172
    %v436 = vunpack.c.l.b16 %v173
    %v437 = vunpack.c.l.b16 %v174
    %v438 = vunpack.c.l.b16 %v175
    %v439 = vunpack.c.l.b16 %v176
    %v440 = vunpack.c.l.b16 %v177
    %v441 = vunpack.c.l.b16 %v178
    %v442 = vunpack.c.l.b16 %v179
    %v443 = vunpack.c.l.b16 %v180
    %v444 = vunpack.c.l.b16 %v181
    %v445 = vunpack.c.l.b16 %v182
    %v446 = vunpack.c.l.b16 %v183
    %v447 = vunpack.c.l.b16 %v184
    %v448 = vunpack.c.l.b16 %v185
    %v449 = vunpack.c.l.b16 %v186
    %v450 = vunpack.c.l.b16 %v187
    %v451 = vunpack.c.l.b16 %v188
    %v452 = vunpack.c.l.b16 %v189
    %v453 = vunpack.c.l.b16 %v190
    %v454 = vunpack.c.l.b16 %v191
    %v455 = vunpack.c.l.b16 %v192
    %v456 = vunpack.c.l.b16 %v193
    %v457 = vunpack.c.l.b16 %v194
    %v458 = vunpack.c.l.b16 %v195
    %v459 = vunpack.c.l.b16 %v196
    %v460 = vunpack.c.l.b16 %v197
    %v461 = vunpack.c.l.b16 %v198
    %v462 = vunpack.c.l.b16 %v199
    %v463 = vunpack.c.l.b16 %v200
    %v464 = vunpack.c.l.b16 %v201
    %v465 = vunpack.c.l.b16 %v202
    %v466 = vunpack.c.l.b16 %v203
    %v467 = vunpack.c.l.b16 %v204
    %v468 = vunpack.c.l.b16 %v205
    %v469 = vunpack.c.l.b16 %v206
    %v470 = vunpack.c.l.b16 %v207
    %v471 = vunpack.c.l.b16 %v208
    %v472 = vunpack.c.l.b16 %v209
    %v473 = vunpack.c.l.b16 %v210
    %v474 = vunpack.c.l.b16 %v211
    %v475 = vunpack.c.l.b16 %v212
    %v476 = vunpack.c.l.b16 %v213
    %v477 = vunpack.c.l.b16 %v214
    %v478 = vunpack.c.l.b16 %v215
    %v479 = vunpack.c.l.b16 %v216
    %v480 = vunpack.c.l.b16 %v217
    %v481 = vunpack.c.l.b16 %v218
    %v482 = vunpack.c.l.b16 %v219
    %v483 = vunpack.c.l.b16 %v220
    %v484 = vunpack.c.l.b16 %v221
    %v485 = vunpack.c.l.b16 %v222
    %v486 = vunpack.c.l.b16 %v223
    %v487 = vunpack.c.l.b16 %v224
    %v488 = vunpack.c.l.b16 %v225
    %v489 = vunpack.c.l.b16 %v226
    %v490 = vunpack.c.l.b16 %v227
    %v491 = vunpack.c.l.b16 %v228
    %v492 = vunpack.c.l.b16 %v229
    %v493 = vpack.c.b16 %v366, %v365
    %v494 = vpack.c.b16 %v368, %v367
    %v495 = vpack.c.b16 %v370, %v369
    %v496 = vpack.c.b16 %v372, %v371
    %v497 = vpack.c.b16 %v374, %v373
    %v498 = vpack.c.b16 %v376, %v375
    %v499 = vpack.c.b16 %v378, %v377
    %v500 = vpack.c.b16 %v380, %v379
    %v501 = vpack.c.b16 %v382, %v381
    %v502 = vpack.c.b16 %v384, %v383
    %v503 = vpack.c.b16 %v386, %v385
    %v504 = vpack.c.b16 %v388, %v387
    %v505 = vpack.c.b16 %v390, %v389
    %v506 = vpack.c.b16 %v392, %v391
    %v507 = vpack.c.b16 %v394, %v393
    %v508 = vpack.c.b16 %v396, %v395
    %v509 = vpack.c.b16 %v398, %v397
    %v510 = vpack.c.b16 %v400, %v399
    %v511 = vpack.c.b16 %v402, %v401
    %v512 = vpack.c.b16 %v404, %v403
    %v513 = vpack.c.b16 %v406, %v405
    %v514 = vpack.c.b16 %v408, %v407
    %v515 = vpack.c.b16 %v410, %v409
    %v516 = vpack.c.b16 %v412, %v411
    %v517 = vpack.c.b16 %v414, %v413
    %v518 = vpack.c.b16 %v416, %v415
    %v519 = vpack.c.b16 %v418, %v417
    %v520 = vpack.c.b16 %v420, %v419
    %v521 = vpack.c.b16 %v422, %v421
    %v522 = vpack.c.b16 %v424, %v423
    %v523 = vpack.c.b16 %v426, %v425
    %v524 = vpack.c.b16 %v428, %v427
    %v525 = vpack.c.b16 %v430, %v429
    %v526 = vpack.c.b16 %v432, %v431
    %v527 = vpack.c.b16 %v434, %v433
    %v528 = vpack.c.b16 %v436, %v435
    %v529 = vpack.c.b16 %v438, %v437
    %v530 = vpack.c.b16 %v440, %v439
    %v531 = vpack.c.b16 %v442, %v441
    %v532 = vpack.c.b16 %v444, %v443
    %v533 = vpack.c.b16 %v446, %v445
    %v534 = vpack.c.b16 %v448, %v447
    %v535 = vpack.c.b16 %v450, %v449
    %v536 = vpack.c.b16 %v452, %v451
    %v537 = vpack.c.b16 %v454, %v453
    %v538 = vpack.c.b16 %v456, %v455
    %v539 = vpack.c.b16 %v458, %v457
    %v540 = vpack.c.b16 %v460, %v459
    %v541 = vpack.c.b16 %v462, %v461
    %v542 = vpack.c.b16 %v464, %v463
    %v543 = vpack.c.b16 %v466, %v465
    %v544 = vpack.c.b16 %v468, %v467
    %v545 = vpack.c.b16 %v470, %v469
    %v546 = vpack.c.b16 %v472, %v471
    %v547 = vpack.c.b16 %v474, %v473
    %v548 = vpack.c.b16 %v476, %v475
    %v549 = vpack.c.b16 %v478, %v477
    %v550 = vpack.c.b16 %v480, %v479
    %v551 = vpack.c.b16 %v482, %v481
    %v552 = vpack.c.b16 %v484, %v483
    %v553 = vpack.c.b16 %v486, %v485
    %v554 = vpack.c.b16 %v488, %v487
    %v555 = vpack.c.b16 %v490, %v489
    %v556 = vpack.c.b16 %v492, %v491
    %621 = vmatprep.subr.bf16.mxu0 0
    %622 = vmatpush1.bf16.msra.mxu0 %v500
    %623 = vmatprep.subr.bf16.mxu0 0
    %624 = vmatpush1.bf16.msra.mxu0 %v499
    %625 = vmatprep.subr.bf16.mxu0 0
    %626 = vmatpush1.bf16.msra.mxu0 %v498
    %627 = vmatprep.subr.bf16.mxu0 0
    %628 = vmatpush1.bf16.msra.mxu0 %v497
    %629 = vmatprep.subr.bf16.mxu0 0
    %630 = vmatpush1.bf16.msra.mxu0 %v496
    %631 = vmatprep.subr.bf16.mxu0 0
    %632 = vmatpush1.bf16.msra.mxu0 %v495
    %633 = vmatprep.subr.bf16.mxu0 0
    %634 = vmatpush1.bf16.msra.mxu0 %v494
    %635 = vmatprep.subr.bf16.mxu0 0
    %636 = vmatpush1.bf16.msra.mxu0 %v493
    %637 = vmatprep.subr.bf16.mxu0 0
    %638 = vmatpush2.bf16.msra.mxu0 %v508
    %639 = vmatprep.subr.bf16.mxu0 0
    %640 = vmatpush2.bf16.msra.mxu0 %v507
    %641 = vmatprep.subr.bf16.mxu0 0
    %642 = vmatpush2.bf16.msra.mxu0 %v506
    %643 = vmatprep.subr.bf16.mxu0 0
    %644 = vmatpush2.bf16.msra.mxu0 %v505
    %645 = vmatprep.subr.bf16.mxu0 0
    %646 = vmatpush2.bf16.msra.mxu0 %v504
    %647 = vmatprep.subr.bf16.mxu0 0
    %648 = vmatpush2.bf16.msra.mxu0 %v503
    %649 = vmatprep.subr.bf16.mxu0 0
    %650 = vmatpush2.bf16.msra.mxu0 %v502
    %651 = vmatprep.subr.bf16.mxu0 0
    %652 = vmatpush2.bf16.msra.mxu0 %v501
    %653 = vmatprep.mubr.bf16.mxu0 %v95
    %654 = vmatmul.mubr.bf16.gmra.mxu0 %v94
    %v655 = vpop.f32.mrf.mxu0
    %v656 = vadd.f32 %v235, %v655
    %v657 = vpop.f32.mrf.mxu0
    %v658 = vpop.f32.mrf.mxu0
    %v659 = vpop.f32.mrf.mxu0
    %660 = vdwg.mxu0
    %661 = vmatprep.subr.bf16.mxu0 0
    %662 = vmatpush1.bf16.msra.mxu0 %v516
    %663 = vmatprep.subr.bf16.mxu0 0
    %664 = vmatpush1.bf16.msra.mxu0 %v515
    %665 = vmatprep.subr.bf16.mxu0 0
    %666 = vmatpush1.bf16.msra.mxu0 %v514
    %667 = vmatprep.subr.bf16.mxu0 0
    %668 = vmatpush1.bf16.msra.mxu0 %v513
    %669 = vmatprep.subr.bf16.mxu0 0
    %670 = vmatpush1.bf16.msra.mxu0 %v512
    %671 = vmatprep.subr.bf16.mxu0 0
    %672 = vmatpush1.bf16.msra.mxu0 %v511
    %673 = vmatprep.subr.bf16.mxu0 0
    %674 = vmatpush1.bf16.msra.mxu0 %v510
    %675 = vmatprep.subr.bf16.mxu0 0
    %676 = vmatpush1.bf16.msra.mxu0 %v509
    %677 = vmatprep.subr.bf16.mxu0 0
    %678 = vmatpush2.bf16.msra.mxu0 %v524
    %679 = vmatprep.subr.bf16.mxu0 0
    %680 = vmatpush2.bf16.msra.mxu0 %v523
    %681 = vmatprep.subr.bf16.mxu0 0
    %682 = vmatpush2.bf16.msra.mxu0 %v522
    %683 = vmatprep.subr.bf16.mxu0 0
    %684 = vmatpush2.bf16.msra.mxu0 %v521
    %685 = vmatprep.subr.bf16.mxu0 0
    %686 = vmatpush2.bf16.msra.mxu0 %v520
    %687 = vmatprep.subr.bf16.mxu0 0
    %688 = vmatpush2.bf16.msra.mxu0 %v519
    %689 = vmatprep.subr.bf16.mxu0 0
    %690 = vmatpush2.bf16.msra.mxu0 %v518
    %691 = vmatprep.subr.bf16.mxu0 0
    %692 = vmatpush2.bf16.msra.mxu0 %v517
    %693 = vmatprep.mubr.bf16.mxu0 %v97
    %694 = vmatmul.mubr.bf16.gmra.mxu0 %v96
    %v695 = vpop.f32.mrf.mxu0
    %v696 = vadd.f32 %v656, %v695
    %v697 = vpop.f32.mrf.mxu0
    %v698 = vpop.f32.mrf.mxu0
    %v699 = vpop.f32.mrf.mxu0
    %700 = vdwg.mxu0
    %701 = vmatprep.subr.bf16.mxu0 0
    %702 = vmatpush1.bf16.msra.mxu0 %v532
    %703 = vmatprep.subr.bf16.mxu0 0
    %704 = vmatpush1.bf16.msra.mxu0 %v531
    %705 = vmatprep.subr.bf16.mxu0 0
    %706 = vmatpush1.bf16.msra.mxu0 %v530
    %707 = vmatprep.subr.bf16.mxu0 0
    %708 = vmatpush1.bf16.msra.mxu0 %v529
    %709 = vmatprep.subr.bf16.mxu0 0
    %710 = vmatpush1.bf16.msra.mxu0 %v528
    %711 = vmatprep.subr.bf16.mxu0 0
    %712 = vmatpush1.bf16.msra.mxu0 %v527
    %713 = vmatprep.subr.bf16.mxu0 0
    %714 = vmatpush1.bf16.msra.mxu0 %v526
    %715 = vmatprep.subr.bf16.mxu0 0
    %716 = vmatpush1.bf16.msra.mxu0 %v525
    %717 = vmatprep.subr.bf16.mxu0 0
    %718 = vmatpush2.bf16.msra.mxu0 %v540
    %719 = vmatprep.subr.bf16.mxu0 0
    %720 = vmatpush2.bf16.msra.mxu0 %v539
    %721 = vmatprep.subr.bf16.mxu0 0
    %722 = vmatpush2.bf16.msra.mxu0 %v538
    %723 = vmatprep.subr.bf16.mxu0 0
    %724 = vmatpush2.bf16.msra.mxu0 %v537
    %725 = vmatprep.subr.bf16.mxu0 0
    %726 = vmatpush2.bf16.msra.mxu0 %v536
    %727 = vmatprep.subr.bf16.mxu0 0
    %728 = vmatpush2.bf16.msra.mxu0 %v535
    %729 = vmatprep.subr.bf16.mxu0 0
    %730 = vmatpush2.bf16.msra.mxu0 %v534
    %731 = vmatprep.subr.bf16.mxu0 0
    %732 = vmatpush2.bf16.msra.mxu0 %v533
    %733 = vmatprep.mubr.bf16.mxu0 %v99
    %734 = vmatmul.mubr.bf16.gmra.mxu0 %v98
    %v735 = vpop.f32.mrf.mxu0
    %v736 = vadd.f32 %v696, %v735
    %v737 = vpop.f32.mrf.mxu0
    %v738 = vpop.f32.mrf.mxu0
    %v739 = vpop.f32.mrf.mxu0
    %740 = vdwg.mxu0
    %741 = vmatprep.subr.bf16.mxu0 0
    %742 = vmatpush1.bf16.msra.mxu0 %v548
    %743 = vmatprep.subr.bf16.mxu0 0
    %744 = vmatpush1.bf16.msra.mxu0 %v547
    %745 = vmatprep.subr.bf16.mxu0 0
    %746 = vmatpush1.bf16.msra.mxu0 %v546
    %747 = vmatprep.subr.bf16.mxu0 0
    %748 = vmatpush1.bf16.msra.mxu0 %v545
    %749 = vmatprep.subr.bf16.mxu0 0
    %750 = vmatpush1.bf16.msra.mxu0 %v544
    %751 = vmatprep.subr.bf16.mxu0 0
    %752 = vmatpush1.bf16.msra.mxu0 %v543
    %753 = vmatprep.subr.bf16.mxu0 0
    %754 = vmatpush1.bf16.msra.mxu0 %v542
    %755 = vmatprep.subr.bf16.mxu0 0
    %756 = vmatpush1.bf16.msra.mxu0 %v541
    %757 = vmatprep.subr.bf16.mxu0 0
    %758 = vmatpush2.bf16.msra.mxu0 %v556
    %759 = vmatprep.subr.bf16.mxu0 0
    %760 = vmatpush2.bf16.msra.mxu0 %v555
    %761 = vmatprep.subr.bf16.mxu0 0
    %762 = vmatpush2.bf16.msra.mxu0 %v554
    %763 = vmatprep.subr.bf16.mxu0 0
    %764 = vmatpush2.bf16.msra.mxu0 %v553
    %765 = vmatprep.subr.bf16.mxu0 0
    %766 = vmatpush2.bf16.msra.mxu0 %v552
    %767 = vmatprep.subr.bf16.mxu0 0
    %768 = vmatpush2.bf16.msra.mxu0 %v551
    %769 = vmatprep.subr.bf16.mxu0 0
    %770 = vmatpush2.bf16.msra.mxu0 %v550
    %771 = vmatprep.subr.bf16.mxu0 0
    %772 = vmatpush2.bf16.msra.mxu0 %v549
    %773 = vmatprep.mubr.bf16.mxu0 %v101
    %774 = vmatmul.mubr.bf16.gmra.mxu0 %v100
    %v775 = vpop.f32.mrf.mxu0
    %v776 = vadd.f32 %v736, %v775
    %v777 = vpop.f32.mrf.mxu0
    %v778 = vpop.f32.mrf.mxu0
    %v779 = vpop.f32.mrf.mxu0
    %780 = vdwg.mxu0
    %v781 = vmax.f32 %v776, 0.0
    %v782 = vld [vmem:[%s4] sm:$0x1]
    %v784 = vlaneseq
    %v785 = vshrl.u32 %v784, 7
    %v786 = vsub.s32 0, %v785
    %v787 = vrot.slane %v782, %v786
    %v789 = vmul.f32 %v781, %v787
    %vm790 = vcmask 1041408
    %v791 = vsel %vm790, %v789, 0.0
    %792 = vadd.xlane.f32.xlu0 %v791
    %v793 = vpop.xlane.xlu0 %792
    %s794 = sld [smem:[#allocation2]]
    %v795 = vstv %s794
    %v796 = vadd.f32 %v793, %v795
    %v797 = vsub.f32 0.0, %v796
    %v798 = vmul.f32 %v797, 1.442695
    %v799 = vpow.pop %v798
    %v800 = vadd.f32 %v799, 1.0
    %v801 = vrcp.pop %v800
    %v802 = vmul.f32 1.0, %v801
    %vm803 = vcmask 1024
    %804 = vst.msk [vmem:[%s5] sm:$0x3] %vm803, %v802
    // Predicated region
    $region30: #{tpu_custom_call.1} parent=1 // pred_check
      _
    $region31: #{tpu_custom_call.1} parent=1 // pred_check_branch
      %806 = sbr.rel (0) target = $region33
    $region32: #{tpu_custom_call.1} parent=1 // pred_region
      _
    $region33: #{tpu_custom_call.1} parent=1 // pred_fallthru
      _
    // Predicated region
    $region34: #{tpu_custom_call.1} parent=1 // pred_check
      _
    $region35: #{tpu_custom_call.1} parent=1 // pred_check_branch
      %808 = sbr.rel (0) target = $region37
    $region36: #{tpu_custom_call.1} parent=1 // pred_region
      _
    $region37: #{tpu_custom_call.1} parent=1 // pred_fallthru
      _
    %809 = vsyncpa [#allocation4], 1
    %810 = vsyncpa [#allocation6], 1

</llo_original>
